<compile_context>
chip_gen: v7x
topology: tpu7x:2x2x1
jax: 0.10.0
libtpu: 0.0.40
codegen_flags: <defaults>
</compile_context>

<pallas_src>
import jax
import jax.numpy as jnp
from jax.experimental import pallas as pl
from jax.experimental.pallas import tpu as pltpu

# Small, lane-friendly shapes for this synthetic harness (module default is
# hidden=200; at real size pad hidden to 256 so 4H=1024 stays vreg-aligned).
SEQ_LEN = 8
INPUT_SIZE = 1
HIDDEN = 32          # 4*HIDDEN == 128 -> one full vreg of gates
OUTPUT_SIZE = 1

# ---- packed parameter slab layout (rows x 128 lanes) -------------------------
R_WHH = 0                          # rows [0, H)      : W_hh  (H, 4H)
R_WIH = HIDDEN                     # rows [H, H+in)   : W_ih  (in, 4H)
R_B = R_WIH + INPUT_SIZE           # row              : b_ih + b_hh (1, 4H)
R_WLIN = R_B + 1                   # row, lanes 0:H   : W_lin row
R_BLIN = R_WLIN + 1                # row, lane 0      : b_lin
SLAB_ROWS = 40                     # padded to a sublane multiple of 8


def lstm_kernel(x_ref, slab_ref, out_ref):
    """Full LSTM recurrence + final Linear for one sequence (batch=1)."""
    H = HIDDEN
    G = 4 * H
    seq_len = x_ref.shape[0]

    # Static views into the single packed weight slab (no extra DMAs).
    whh = slab_ref[R_WHH:R_WHH + H, :]            # (H, 4H)  gate cols [f,i,o,g], i/f/o *0.5
    wih = slab_ref[R_WIH:R_WIH + INPUT_SIZE, :]   # (in, 4H)
    b = slab_ref[R_B:R_B + 1, :]                  # (1, 4H)

    # ---- Hoisted input projection for ALL timesteps: (seq_len, 4H) ----------
    if INPUT_SIZE == 1:
        # (seq, 1) * (1, 4H) broadcast -> pure VPU outer product, no MXU.
        x_proj = x_ref[...] * wih + b
    else:
        x_proj = (
            jnp.dot(x_ref[...], wih, preferred_element_type=jnp.float32) + b
        )

    # Sigmoid lanes (f, i, o = lanes 0:3H) were pre-scaled by 0.5, so
    # sigmoid(z) = 0.5 * tanh(z/2) + 0.5; the g block (lanes 3H:4H) stays tanh.
    lane = jax.lax.broadcasted_iota(jnp.int32, (1, G), 1)
    is_g = lane >= 3 * H

    # Zero initial state (matches the module's freshly-constructed self.hidden);
    # h/c are carried in registers across the unrolled loop (no VMEM traffic).
    h = jnp.zeros((1, H), jnp.float32)
    c = jnp.zeros((1, H), jnp.float32)

    # ---- Fully unrolled time recurrence (SEQ_LEN is a compile-time const) ---
    for t in range(seq_len):
        gates = x_proj[t:t + 1, :] + jnp.dot(
            h, whh, preferred_element_type=jnp.float32)   # (1, 4H), lanes [f|i|o|g]

        th = jnp.tanh(gates)                               # ONE full-width EUP pass
        act = jnp.where(is_g, th, 0.5 * th + 0.5)          # [f | i | o | g] activated

        # Half-vreg roll (shift = 2H = 64 lanes): direction-agnostic block swap
        # [f|i|o|g] -> [o|g|f|i]; overlaps VPU work on the XLU slot.
        rolled = pltpu.roll(act, shift=2 * H, axis=1)

        f_ = act[:, :H]                                    # lane offset 0: free
        o_ = rolled[:, :H]                                 # lane offset 0: free
        ig = (act * rolled)[:, H:2 * H]                    # full-width VPU mul -> i*g

        c = f_ * c + ig
        h = o_ * jnp.tanh(c)

    # pred[-1] == Linear(h_T); 1-wide output -> VPU multiply + lane reduce, no MXU.
    wlin = slab_ref[R_WLIN:R_WLIN + 1, 0:H]                # (1, H)
    blin = slab_ref[R_BLIN:R_BLIN + 1, 0:1]                # (1, 1)
    out_ref[...] = jnp.sum(h * wlin, axis=1, keepdims=True) + blin


def lstm_forward(seq, slab):
    """seq: (seq_len,) float32  ->  returns (output_size,) == pred[-1]."""
    # seq.view(len(seq), 1, -1) with the batch dim (==1) dropped.
    x = seq.reshape(SEQ_LEN, INPUT_SIZE).astype(jnp.float32)
    out = pl.pallas_call(
        lstm_kernel,
        out_shape=jax.ShapeDtypeStruct((1, OUTPUT_SIZE), jnp.float32),
        in_specs=[pl.BlockSpec(memory_space=pltpu.MemorySpace.VMEM),
                  pl.BlockSpec(memory_space=pltpu.MemorySpace.VMEM)],
        out_specs=pl.BlockSpec(memory_space=pltpu.MemorySpace.VMEM),
    )(x, slab)
    return out[0]                                          # shape (output_size,)


def init_params(key):
    """PyTorch-layout params with uniform(-1/sqrt(H), 1/sqrt(H)) init."""
    k = 1.0 / jnp.sqrt(jnp.float32(HIDDEN))
    keys = jax.random.split(key, 6)
    # PyTorch shapes: weight_ih (4H, in), weight_hh (4H, H), biases (4H,); gate order [i,f,g,o].
    w_ih_pt = jax.random.uniform(keys[0], (4 * HIDDEN, INPUT_SIZE), jnp.float32, -k, k)
    w_hh_pt = jax.random.uniform(keys[1], (4 * HIDDEN, HIDDEN), jnp.float32, -k, k)
    b_ih = jax.random.uniform(keys[2], (4 * HIDDEN,), jnp.float32, -k, k)
    b_hh = jax.random.uniform(keys[3], (4 * HIDDEN,), jnp.float32, -k, k)
    # Linear: weight (out, H), bias (out,)
    w_lin_pt = jax.random.uniform(keys[4], (OUTPUT_SIZE, HIDDEN), jnp.float32, -k, k)
    b_lin = jax.random.uniform(keys[5], (OUTPUT_SIZE,), jnp.float32, -k, k)
    return w_ih_pt, w_hh_pt, b_ih, b_hh, w_lin_pt, b_lin


def _permute_gates_rows(a):
    """PyTorch gate-row order [i, f, g, o] -> kernel lane order [f, i, o, g]."""
    i, f, g, o = jnp.split(a, 4, axis=0)
    return jnp.concatenate([f, i, o, g], axis=0)


def pack_params(w_ih_pt, w_hh_pt, b_ih, b_hh, w_lin_pt, b_lin):
    """Build the single packed (SLAB_ROWS, 4H) f32 weight slab for the kernel."""
    H, G = HIDDEN, 4 * HIDDEN
    # Sigmoid gates f/i/o (lanes 0:3H) pre-scaled by 0.5 (exact), g left alone.
    scale = jnp.concatenate([jnp.full((3 * H,), 0.5, jnp.float32),
                             jnp.ones((H,), jnp.float32)])
    w_ih = _permute_gates_rows(w_ih_pt).T * scale          # (in, 4H)
    w_hh = _permute_gates_rows(w_hh_pt).T * scale          # (H, 4H)
    bias = _permute_gates_rows(b_ih + b_hh) * scale        # (4H,) pre-summed (exact)

    slab = jnp.zeros((SLAB_ROWS, G), jnp.float32)
    slab = slab.at[R_WHH:R_WHH + H, :].set(w_hh)
    slab = slab.at[R_WIH:R_WIH + INPUT_SIZE, :].set(w_ih)
    slab = slab.at[R_B, :].set(bias)
    slab = slab.at[R_WLIN, 0:H].set(w_lin_pt[0, :])
    slab = slab.at[R_BLIN, 0].set(b_lin[0])
    return slab


def reference_forward(seq, w_ih_pt, w_hh_pt, b_ih, b_hh, w_lin_pt, b_lin):
    """Pure-JAX reference with exact PyTorch LSTM semantics (gate order i,f,g,o)."""
    H = HIDDEN
    x = seq.reshape(SEQ_LEN, INPUT_SIZE).astype(jnp.float32)
    h = jnp.zeros((1, H), jnp.float32)
    c = jnp.zeros((1, H), jnp.float32)
    for t in range(SEQ_LEN):
        gates = x[t:t + 1] @ w_ih_pt.T + h @ w_hh_pt.T + (b_ih + b_hh)[None, :]
        i = jax.nn.sigmoid(gates[:, 0:H])
        f = jax.nn.sigmoid(gates[:, H:2 * H])
        g = jnp.tanh(gates[:, 2 * H:3 * H])
        o = jax.nn.sigmoid(gates[:, 3 * H:4 * H])
        c = f * c + i * g
        h = o * jnp.tanh(c)
    return (h @ w_lin_pt.T + b_lin[None, :])[0]


if __name__ == "__main__":
    key = jax.random.PRNGKey(0)
    pkey, xkey = jax.random.split(key)
    params = init_params(pkey)
    slab = pack_params(*params)
    seq = jax.random.normal(xkey, (SEQ_LEN,), jnp.float32)

    pred = lstm_forward(seq, slab)
    pred = jax.block_until_ready(pred)

    ref = reference_forward(seq, *params)
    assert pred.shape == (OUTPUT_SIZE,)
    # sigmoid-via-tanh rewrite introduces only few-ULP deltas vs jax.nn.sigmoid.
    assert jnp.allclose(pred, ref, atol=2e-5, rtol=2e-5), (pred, ref)
    print("KERNEL_OK")
</pallas_src>

<mosaic_0001>
module attributes {stable_mosaic.version = 11 : i64} {
  func.func @lstm_kernel(%arg0: memref<8x1xf32, #tpu.memory_space<vmem>>, %arg1: memref<40x128xf32, #tpu.memory_space<vmem>>, %arg2: memref<1x1xf32, #tpu.memory_space<vmem>>) attributes {dimension_semantics = [], scalar_prefetch = 0 : i64, scratch_operands = 0 : i64, tpu.core_type = #tpu.core_type<tc>} {
    %c0 = arith.constant 0 : index
    %c0_0 = arith.constant 0 : index
    %0 = vector.load %arg1[%c0, %c0_0] : memref<40x128xf32, #tpu.memory_space<vmem>>, vector<32x128xf32>
    %c32 = arith.constant 32 : index
    %c0_1 = arith.constant 0 : index
    %1 = vector.load %arg1[%c32, %c0_1] : memref<40x128xf32, #tpu.memory_space<vmem>>, vector<1x128xf32>
    %c33 = arith.constant 33 : index
    %c0_2 = arith.constant 0 : index
    %2 = vector.load %arg1[%c33, %c0_2] : memref<40x128xf32, #tpu.memory_space<vmem>>, vector<1x128xf32>
    %c0_3 = arith.constant 0 : index
    %c0_4 = arith.constant 0 : index
    %3 = vector.load %arg0[%c0_3, %c0_4] : memref<8x1xf32, #tpu.memory_space<vmem>>, vector<8x1xf32>
    %4 = vector.broadcast %3 : vector<8x1xf32> to vector<8x128xf32>
    %5 = vector.broadcast %1 : vector<1x128xf32> to vector<8x128xf32>
    %6 = arith.mulf %4, %5 : vector<8x128xf32>
    %7 = vector.broadcast %2 : vector<1x128xf32> to vector<8x128xf32>
    %8 = arith.addf %6, %7 : vector<8x128xf32>
    %9 = tpu.iota {dimensions = array<i32: 1>} : vector<1x128xi32>
    %c96_i32 = arith.constant 96 : i32
    %10 = vector.broadcast %c96_i32 : i32 to vector<1x128xi32>
    %11 = arith.cmpi sge, %9, %10 : vector<1x128xi32>
    %cst = arith.constant 0.000000e+00 : f32
    %12 = vector.broadcast %cst : f32 to vector<1x32xf32>
    %cst_5 = arith.constant 0.000000e+00 : f32
    %13 = vector.broadcast %cst_5 : f32 to vector<1x32xf32>
    %14 = vector.extract_strided_slice %8 {offsets = [0, 0], sizes = [1, 128], strides = [1, 1]} : vector<8x128xf32> to vector<1x128xf32>
    %cst_6 = arith.constant dense<0.000000e+00> : vector<1x128xf32>
    %15 = tpu.matmul %12, %0, %cst_6 {dimension_numbers = #tpu.dot_dimension_numbers<[1], [0], [0], [1], [0, 0, 1, 1], [], []>} : vector<1x32xf32>, vector<32x128xf32>, vector<1x128xf32> -> vector<1x128xf32>
    %16 = arith.addf %14, %15 : vector<1x128xf32>
    %17 = math.tanh %16 : vector<1x128xf32>
    %cst_7 = arith.constant 5.000000e-01 : f32
    %18 = vector.broadcast %cst_7 : f32 to vector<1x128xf32>
    %19 = arith.mulf %18, %17 : vector<1x128xf32>
    %cst_8 = arith.constant 5.000000e-01 : f32
    %20 = vector.broadcast %cst_8 : f32 to vector<1x128xf32>
    %21 = arith.addf %19, %20 : vector<1x128xf32>
    %22 = arith.select %11, %17, %21 : vector<1x128xi1>, vector<1x128xf32>
    %c64_i32 = arith.constant 64 : i32
    %23 = tpu.dynamic_rotate %22 by %c64_i32 dim 1 : vector<1x128xf32>, i32 -> vector<1x128xf32>
    %24 = vector.extract_strided_slice %22 {offsets = [0, 0], sizes = [1, 32], strides = [1, 1]} : vector<1x128xf32> to vector<1x32xf32>
    %25 = vector.extract_strided_slice %23 {offsets = [0, 0], sizes = [1, 32], strides = [1, 1]} : vector<1x128xf32> to vector<1x32xf32>
    %26 = arith.mulf %22, %23 : vector<1x128xf32>
    %27 = vector.extract_strided_slice %26 {offsets = [0, 32], sizes = [1, 32], strides = [1, 1]} : vector<1x128xf32> to vector<1x32xf32>
    %28 = arith.mulf %24, %13 : vector<1x32xf32>
    %29 = arith.addf %28, %27 : vector<1x32xf32>
    %30 = math.tanh %29 : vector<1x32xf32>
    %31 = arith.mulf %25, %30 : vector<1x32xf32>
    %32 = vector.extract_strided_slice %8 {offsets = [1, 0], sizes = [1, 128], strides = [1, 1]} : vector<8x128xf32> to vector<1x128xf32>
    %cst_9 = arith.constant dense<0.000000e+00> : vector<1x128xf32>
    %33 = tpu.matmul %31, %0, %cst_9 {dimension_numbers = #tpu.dot_dimension_numbers<[1], [0], [0], [1], [0, 0, 1, 1], [], []>} : vector<1x32xf32>, vector<32x128xf32>, vector<1x128xf32> -> vector<1x128xf32>
    %34 = arith.addf %32, %33 : vector<1x128xf32>
    %35 = math.tanh %34 : vector<1x128xf32>
    %cst_10 = arith.constant 5.000000e-01 : f32
    %36 = vector.broadcast %cst_10 : f32 to vector<1x128xf32>
    %37 = arith.mulf %36, %35 : vector<1x128xf32>
    %cst_11 = arith.constant 5.000000e-01 : f32
    %38 = vector.broadcast %cst_11 : f32 to vector<1x128xf32>
    %39 = arith.addf %37, %38 : vector<1x128xf32>
    %40 = arith.select %11, %35, %39 : vector<1x128xi1>, vector<1x128xf32>
    %c64_i32_12 = arith.constant 64 : i32
    %41 = tpu.dynamic_rotate %40 by %c64_i32_12 dim 1 : vector<1x128xf32>, i32 -> vector<1x128xf32>
    %42 = vector.extract_strided_slice %40 {offsets = [0, 0], sizes = [1, 32], strides = [1, 1]} : vector<1x128xf32> to vector<1x32xf32>
    %43 = vector.extract_strided_slice %41 {offsets = [0, 0], sizes = [1, 32], strides = [1, 1]} : vector<1x128xf32> to vector<1x32xf32>
    %44 = arith.mulf %40, %41 : vector<1x128xf32>
    %45 = vector.extract_strided_slice %44 {offsets = [0, 32], sizes = [1, 32], strides = [1, 1]} : vector<1x128xf32> to vector<1x32xf32>
    %46 = arith.mulf %42, %29 : vector<1x32xf32>
    %47 = arith.addf %46, %45 : vector<1x32xf32>
    %48 = math.tanh %47 : vector<1x32xf32>
    %49 = arith.mulf %43, %48 : vector<1x32xf32>
    %50 = vector.extract_strided_slice %8 {offsets = [2, 0], sizes = [1, 128], strides = [1, 1]} : vector<8x128xf32> to vector<1x128xf32>
    %cst_13 = arith.constant dense<0.000000e+00> : vector<1x128xf32>
    %51 = tpu.matmul %49, %0, %cst_13 {dimension_numbers = #tpu.dot_dimension_numbers<[1], [0], [0], [1], [0, 0, 1, 1], [], []>} : vector<1x32xf32>, vector<32x128xf32>, vector<1x128xf32> -> vector<1x128xf32>
    %52 = arith.addf %50, %51 : vector<1x128xf32>
    %53 = math.tanh %52 : vector<1x128xf32>
    %cst_14 = arith.constant 5.000000e-01 : f32
    %54 = vector.broadcast %cst_14 : f32 to vector<1x128xf32>
    %55 = arith.mulf %54, %53 : vector<1x128xf32>
    %cst_15 = arith.constant 5.000000e-01 : f32
    %56 = vector.broadcast %cst_15 : f32 to vector<1x128xf32>
    %57 = arith.addf %55, %56 : vector<1x128xf32>
    %58 = arith.select %11, %53, %57 : vector<1x128xi1>, vector<1x128xf32>
    %c64_i32_16 = arith.constant 64 : i32
    %59 = tpu.dynamic_rotate %58 by %c64_i32_16 dim 1 : vector<1x128xf32>, i32 -> vector<1x128xf32>
    %60 = vector.extract_strided_slice %58 {offsets = [0, 0], sizes = [1, 32], strides = [1, 1]} : vector<1x128xf32> to vector<1x32xf32>
    %61 = vector.extract_strided_slice %59 {offsets = [0, 0], sizes = [1, 32], strides = [1, 1]} : vector<1x128xf32> to vector<1x32xf32>
    %62 = arith.mulf %58, %59 : vector<1x128xf32>
    %63 = vector.extract_strided_slice %62 {offsets = [0, 32], sizes = [1, 32], strides = [1, 1]} : vector<1x128xf32> to vector<1x32xf32>
    %64 = arith.mulf %60, %47 : vector<1x32xf32>
    %65 = arith.addf %64, %63 : vector<1x32xf32>
    %66 = math.tanh %65 : vector<1x32xf32>
    %67 = arith.mulf %61, %66 : vector<1x32xf32>
    %68 = vector.extract_strided_slice %8 {offsets = [3, 0], sizes = [1, 128], strides = [1, 1]} : vector<8x128xf32> to vector<1x128xf32>
    %cst_17 = arith.constant dense<0.000000e+00> : vector<1x128xf32>
    %69 = tpu.matmul %67, %0, %cst_17 {dimension_numbers = #tpu.dot_dimension_numbers<[1], [0], [0], [1], [0, 0, 1, 1], [], []>} : vector<1x32xf32>, vector<32x128xf32>, vector<1x128xf32> -> vector<1x128xf32>
    %70 = arith.addf %68, %69 : vector<1x128xf32>
    %71 = math.tanh %70 : vector<1x128xf32>
    %cst_18 = arith.constant 5.000000e-01 : f32
    %72 = vector.broadcast %cst_18 : f32 to vector<1x128xf32>
    %73 = arith.mulf %72, %71 : vector<1x128xf32>
    %cst_19 = arith.constant 5.000000e-01 : f32
    %74 = vector.broadcast %cst_19 : f32 to vector<1x128xf32>
    %75 = arith.addf %73, %74 : vector<1x128xf32>
    %76 = arith.select %11, %71, %75 : vector<1x128xi1>, vector<1x128xf32>
    %c64_i32_20 = arith.constant 64 : i32
    %77 = tpu.dynamic_rotate %76 by %c64_i32_20 dim 1 : vector<1x128xf32>, i32 -> vector<1x128xf32>
    %78 = vector.extract_strided_slice %76 {offsets = [0, 0], sizes = [1, 32], strides = [1, 1]} : vector<1x128xf32> to vector<1x32xf32>
    %79 = vector.extract_strided_slice %77 {offsets = [0, 0], sizes = [1, 32], strides = [1, 1]} : vector<1x128xf32> to vector<1x32xf32>
    %80 = arith.mulf %76, %77 : vector<1x128xf32>
    %81 = vector.extract_strided_slice %80 {offsets = [0, 32], sizes = [1, 32], strides = [1, 1]} : vector<1x128xf32> to vector<1x32xf32>
    %82 = arith.mulf %78, %65 : vector<1x32xf32>
    %83 = arith.addf %82, %81 : vector<1x32xf32>
    %84 = math.tanh %83 : vector<1x32xf32>
    %85 = arith.mulf %79, %84 : vector<1x32xf32>
    %86 = vector.extract_strided_slice %8 {offsets = [4, 0], sizes = [1, 128], strides = [1, 1]} : vector<8x128xf32> to vector<1x128xf32>
    %cst_21 = arith.constant dense<0.000000e+00> : vector<1x128xf32>
    %87 = tpu.matmul %85, %0, %cst_21 {dimension_numbers = #tpu.dot_dimension_numbers<[1], [0], [0], [1], [0, 0, 1, 1], [], []>} : vector<1x32xf32>, vector<32x128xf32>, vector<1x128xf32> -> vector<1x128xf32>
    %88 = arith.addf %86, %87 : vector<1x128xf32>
    %89 = math.tanh %88 : vector<1x128xf32>
    %cst_22 = arith.constant 5.000000e-01 : f32
    %90 = vector.broadcast %cst_22 : f32 to vector<1x128xf32>
    %91 = arith.mulf %90, %89 : vector<1x128xf32>
    %cst_23 = arith.constant 5.000000e-01 : f32
    %92 = vector.broadcast %cst_23 : f32 to vector<1x128xf32>
    %93 = arith.addf %91, %92 : vector<1x128xf32>
    %94 = arith.select %11, %89, %93 : vector<1x128xi1>, vector<1x128xf32>
    %c64_i32_24 = arith.constant 64 : i32
    %95 = tpu.dynamic_rotate %94 by %c64_i32_24 dim 1 : vector<1x128xf32>, i32 -> vector<1x128xf32>
    %96 = vector.extract_strided_slice %94 {offsets = [0, 0], sizes = [1, 32], strides = [1, 1]} : vector<1x128xf32> to vector<1x32xf32>
    %97 = vector.extract_strided_slice %95 {offsets = [0, 0], sizes = [1, 32], strides = [1, 1]} : vector<1x128xf32> to vector<1x32xf32>
    %98 = arith.mulf %94, %95 : vector<1x128xf32>
    %99 = vector.extract_strided_slice %98 {offsets = [0, 32], sizes = [1, 32], strides = [1, 1]} : vector<1x128xf32> to vector<1x32xf32>
    %100 = arith.mulf %96, %83 : vector<1x32xf32>
    %101 = arith.addf %100, %99 : vector<1x32xf32>
    %102 = math.tanh %101 : vector<1x32xf32>
    %103 = arith.mulf %97, %102 : vector<1x32xf32>
    %104 = vector.extract_strided_slice %8 {offsets = [5, 0], sizes = [1, 128], strides = [1, 1]} : vector<8x128xf32> to vector<1x128xf32>
    %cst_25 = arith.constant dense<0.000000e+00> : vector<1x128xf32>
    %105 = tpu.matmul %103, %0, %cst_25 {dimension_numbers = #tpu.dot_dimension_numbers<[1], [0], [0], [1], [0, 0, 1, 1], [], []>} : vector<1x32xf32>, vector<32x128xf32>, vector<1x128xf32> -> vector<1x128xf32>
    %106 = arith.addf %104, %105 : vector<1x128xf32>
    %107 = math.tanh %106 : vector<1x128xf32>
    %cst_26 = arith.constant 5.000000e-01 : f32
    %108 = vector.broadcast %cst_26 : f32 to vector<1x128xf32>
    %109 = arith.mulf %108, %107 : vector<1x128xf32>
    %cst_27 = arith.constant 5.000000e-01 : f32
    %110 = vector.broadcast %cst_27 : f32 to vector<1x128xf32>
    %111 = arith.addf %109, %110 : vector<1x128xf32>
    %112 = arith.select %11, %107, %111 : vector<1x128xi1>, vector<1x128xf32>
    %c64_i32_28 = arith.constant 64 : i32
    %113 = tpu.dynamic_rotate %112 by %c64_i32_28 dim 1 : vector<1x128xf32>, i32 -> vector<1x128xf32>
    %114 = vector.extract_strided_slice %112 {offsets = [0, 0], sizes = [1, 32], strides = [1, 1]} : vector<1x128xf32> to vector<1x32xf32>
    %115 = vector.extract_strided_slice %113 {offsets = [0, 0], sizes = [1, 32], strides = [1, 1]} : vector<1x128xf32> to vector<1x32xf32>
    %116 = arith.mulf %112, %113 : vector<1x128xf32>
    %117 = vector.extract_strided_slice %116 {offsets = [0, 32], sizes = [1, 32], strides = [1, 1]} : vector<1x128xf32> to vector<1x32xf32>
    %118 = arith.mulf %114, %101 : vector<1x32xf32>
    %119 = arith.addf %118, %117 : vector<1x32xf32>
    %120 = math.tanh %119 : vector<1x32xf32>
    %121 = arith.mulf %115, %120 : vector<1x32xf32>
    %122 = vector.extract_strided_slice %8 {offsets = [6, 0], sizes = [1, 128], strides = [1, 1]} : vector<8x128xf32> to vector<1x128xf32>
    %cst_29 = arith.constant dense<0.000000e+00> : vector<1x128xf32>
    %123 = tpu.matmul %121, %0, %cst_29 {dimension_numbers = #tpu.dot_dimension_numbers<[1], [0], [0], [1], [0, 0, 1, 1], [], []>} : vector<1x32xf32>, vector<32x128xf32>, vector<1x128xf32> -> vector<1x128xf32>
    %124 = arith.addf %122, %123 : vector<1x128xf32>
    %125 = math.tanh %124 : vector<1x128xf32>
    %cst_30 = arith.constant 5.000000e-01 : f32
    %126 = vector.broadcast %cst_30 : f32 to vector<1x128xf32>
    %127 = arith.mulf %126, %125 : vector<1x128xf32>
    %cst_31 = arith.constant 5.000000e-01 : f32
    %128 = vector.broadcast %cst_31 : f32 to vector<1x128xf32>
    %129 = arith.addf %127, %128 : vector<1x128xf32>
    %130 = arith.select %11, %125, %129 : vector<1x128xi1>, vector<1x128xf32>
    %c64_i32_32 = arith.constant 64 : i32
    %131 = tpu.dynamic_rotate %130 by %c64_i32_32 dim 1 : vector<1x128xf32>, i32 -> vector<1x128xf32>
    %132 = vector.extract_strided_slice %130 {offsets = [0, 0], sizes = [1, 32], strides = [1, 1]} : vector<1x128xf32> to vector<1x32xf32>
    %133 = vector.extract_strided_slice %131 {offsets = [0, 0], sizes = [1, 32], strides = [1, 1]} : vector<1x128xf32> to vector<1x32xf32>
    %134 = arith.mulf %130, %131 : vector<1x128xf32>
    %135 = vector.extract_strided_slice %134 {offsets = [0, 32], sizes = [1, 32], strides = [1, 1]} : vector<1x128xf32> to vector<1x32xf32>
    %136 = arith.mulf %132, %119 : vector<1x32xf32>
    %137 = arith.addf %136, %135 : vector<1x32xf32>
    %138 = math.tanh %137 : vector<1x32xf32>
    %139 = arith.mulf %133, %138 : vector<1x32xf32>
    %140 = vector.extract_strided_slice %8 {offsets = [7, 0], sizes = [1, 128], strides = [1, 1]} : vector<8x128xf32> to vector<1x128xf32>
    %cst_33 = arith.constant dense<0.000000e+00> : vector<1x128xf32>
    %141 = tpu.matmul %139, %0, %cst_33 {dimension_numbers = #tpu.dot_dimension_numbers<[1], [0], [0], [1], [0, 0, 1, 1], [], []>} : vector<1x32xf32>, vector<32x128xf32>, vector<1x128xf32> -> vector<1x128xf32>
    %142 = arith.addf %140, %141 : vector<1x128xf32>
    %143 = math.tanh %142 : vector<1x128xf32>
    %cst_34 = arith.constant 5.000000e-01 : f32
    %144 = vector.broadcast %cst_34 : f32 to vector<1x128xf32>
    %145 = arith.mulf %144, %143 : vector<1x128xf32>
    %cst_35 = arith.constant 5.000000e-01 : f32
    %146 = vector.broadcast %cst_35 : f32 to vector<1x128xf32>
    %147 = arith.addf %145, %146 : vector<1x128xf32>
    %148 = arith.select %11, %143, %147 : vector<1x128xi1>, vector<1x128xf32>
    %c64_i32_36 = arith.constant 64 : i32
    %149 = tpu.dynamic_rotate %148 by %c64_i32_36 dim 1 : vector<1x128xf32>, i32 -> vector<1x128xf32>
    %150 = vector.extract_strided_slice %148 {offsets = [0, 0], sizes = [1, 32], strides = [1, 1]} : vector<1x128xf32> to vector<1x32xf32>
    %151 = vector.extract_strided_slice %149 {offsets = [0, 0], sizes = [1, 32], strides = [1, 1]} : vector<1x128xf32> to vector<1x32xf32>
    %152 = arith.mulf %148, %149 : vector<1x128xf32>
    %153 = vector.extract_strided_slice %152 {offsets = [0, 32], sizes = [1, 32], strides = [1, 1]} : vector<1x128xf32> to vector<1x32xf32>
    %154 = arith.mulf %150, %137 : vector<1x32xf32>
    %155 = arith.addf %154, %153 : vector<1x32xf32>
    %156 = math.tanh %155 : vector<1x32xf32>
    %157 = arith.mulf %151, %156 : vector<1x32xf32>
    %c34 = arith.constant 34 : index
    %c0_37 = arith.constant 0 : index
    %158 = vector.load %arg1[%c34, %c0_37] : memref<40x128xf32, #tpu.memory_space<vmem>>, vector<1x32xf32>
    %c35 = arith.constant 35 : index
    %c0_38 = arith.constant 0 : index
    %159 = vector.load %arg1[%c35, %c0_38] : memref<40x128xf32, #tpu.memory_space<vmem>>, vector<1x1xf32>
    %160 = arith.mulf %157, %158 : vector<1x32xf32>
    %cst_39 = arith.constant dense<0.000000e+00> : vector<1xf32>
    %161 = vector.multi_reduction <add>, %160, %cst_39 [1] : vector<1x32xf32> to vector<1xf32>
    %162 = vector.shape_cast %161 : vector<1xf32> to vector<1x1xf32>
    %163 = arith.addf %162, %159 : vector<1x1xf32>
    %c0_40 = arith.constant 0 : index
    %c0_41 = arith.constant 0 : index
    %164 = vector.load %arg2[%c0_40, %c0_41] : memref<1x1xf32, #tpu.memory_space<vmem>>, vector<1x1xf32>
    tpu.vector_store %arg2[%c0_40, %c0_41], %163 {strides = array<i32>} : memref<1x1xf32, #tpu.memory_space<vmem>>, vector<1x1xf32>,
    return
  }
}

</mosaic_0001>

<llo_original>
// kernel: tpu_custom_call.1
$region0: #{tpu_custom_call.1}
  #allocation0 [shape = 'u32[]', space=smem, size = 0x4, offset = 0x4, fixed_abs, tag = 'smem constant byte address 0x4 - core index']
  #allocation1 [shape = 'u32[144,128]{1,0:T(1,128)}', space=vmem, size = 0x12000, scoped, tag = 'internal scratch']
  %s0 = inlined_call_operand.vmem [shape: f32[8,1], index: 0, kind: input, shape index: {}]
  %s1 = inlined_call_operand.hbm [shape: f32[40,128], index: 1, kind: input, shape index: {}]
  %s2 = inlined_call_operand.hbm [shape: f32[1,1], index: 2, kind: output, shape index: {}]
  %s3 = sld [smem:[#allocation0]]
  $region22: #{tpu_custom_call.1} parent=0
    _
  %s5 = ssub.s32 1, %s3
  %s6 = scalar_select 0, %s5, %s3
  $region1: #{tpu_custom_call.1} parent=0
    #allocation2 [shape = 'u8[20480]{0}', space=vmem, size = 0x5000, scoped, tag = 'input window, operand 1, single buffered']
    #allocation3 [shape = 's32[1]{0}', space=sflag, size = 0x4, scoped, tag = 'scoped memory for tpu_custom_call.1']
    #allocation4 [shape = 's32[1]{0}', space=sflag, size = 0x4, scoped, tag = 'scoped memory for tpu_custom_call.1']
    #allocation5 [shape = 'u8[512]{0}', space=vmem, size = 0x400, scoped, tag = 'output window, operand 0, single buffered']
    %7 = vsyncpa [#allocation3], 0
    %8 = vsyncpa [#allocation4], 0
    // Predicated region
    $region2: #{tpu_custom_call.1} parent=1 // pred_check
      _
    $region3: #{tpu_custom_call.1} parent=1 // pred_check_branch
      %10 = sbr.rel (0) target = $region5
    $region4: #{tpu_custom_call.1} parent=1 // pred_region
      _
    $region5: #{tpu_custom_call.1} parent=1 // pred_fallthru
      _
    // Predicated region
    $region6: #{tpu_custom_call.1} parent=1 // pred_check
      _
    $region7: #{tpu_custom_call.1} parent=1 // pred_check_branch
      %12 = sbr.rel (0) target = $region9
    $region8: #{tpu_custom_call.1} parent=1 // pred_region
      %s14 = ssub.s32 640, 640
      %15 = vsyncadd [#allocation3], %s14
      %s16 = sshll.u32 [#allocation2], 4
      %s17 = int_to_ptr.vmem [resolvable:$true] %s16
      %22 = dma.hbm_to_vmem [thread:$0]  %s1, 640, %s17, [#allocation3], 128, 128, 8
    $region9: #{tpu_custom_call.1} parent=1 // pred_fallthru
      _
    // Predicated region
    $region10: #{tpu_custom_call.1} parent=1 // pred_check
      _
    $region11: #{tpu_custom_call.1} parent=1 // pred_check_branch
      %24 = sbr.rel (0) target = $region13
    $region12: #{tpu_custom_call.1} parent=1 // pred_region
      %25 = dma.done [#allocation3], 640
    $region13: #{tpu_custom_call.1} parent=1 // pred_fallthru
      _
    %v26 = vld [vmem:[#allocation2] sm:$0xff]
    %v27 = vld [vmem:[#allocation2 + $0x8] sm:$0xff]
    %v28 = vld [vmem:[#allocation2 + $0x10] sm:$0xff]
    %v29 = vld [vmem:[#allocation2 + $0x18] sm:$0xff]
    %v30 = vld [vmem:[#allocation2 + $0x20] sm:$0x1]
    %v31 = vld [vmem:[#allocation2 + $0x21] sm:$0x1]
    %v32 = vld [vmem:[%s0] sm:$0xff]
    %34 = vset.pattern.permute.xlu0 0
    %35 = vperm.xlu0 %34, %v32
    %v36 = vpop.permute.xlu0 %35
    %v38 = vlaneseq
    %v39 = vshrl.u32 %v38, 7
    %v40 = vsub.s32 0, %v39
    %v41 = vrot.slane %v30, %v40
    %v42 = vmul.f32 %v36, %v41
    %v43 = vlaneseq
    %v44 = vshrl.u32 %v43, 7
    %v45 = vsub.s32 0, %v44
    %v46 = vrot.slane %v31, %v45
    %v47 = vadd.f32 %v42, %v46
    %v48 = vlaneseq
    %v49 = vand.u32 %v48, 127
    %vm50 = vcmp.ge.s32.totalorder %v49, 96
    %vm51 = vcmask 261120
    %v53 = vsel %vm51, 0.0, 0
    %55 = vmatprep.subr.mxu0 0.0
    %56 = vmatpush1.msra.mxu0 %v26
    %57 = vmatprep.subr.mxu0 0.0
    %58 = vmatpush1.msra.mxu0 %v27
    %59 = vmatprep.subr.mxu0 0.0
    %60 = vmatpush1.msra.mxu0 %v28
    %61 = vmatprep.subr.mxu0 0.0
    %62 = vmatpush1.msra.mxu0 %v29
    %63 = vmatprep.subr.mxu0 0.0
    %64 = vmatpush1.msra.mxu0 0.0
    %65 = vmatprep.subr.mxu0 0.0
    %66 = vmatpush1.msra.mxu0 0.0
    %67 = vmatprep.subr.mxu0 0.0
    %68 = vmatpush1.msra.mxu0 0.0
    %69 = vmatprep.subr.mxu0 0.0
    %70 = vmatpush1.msra.mxu0 0.0
    %71 = vmatprep.subr.mxu0 0.0
    %72 = vmatpush1.msra.mxu0 0.0
    %73 = vmatprep.subr.mxu0 0.0
    %74 = vmatpush1.msra.mxu0 0.0
    %75 = vmatprep.subr.mxu0 0.0
    %76 = vmatpush1.msra.mxu0 0.0
    %77 = vmatprep.subr.mxu0 0.0
    %78 = vmatpush1.msra.mxu0 0.0
    %79 = vmatprep.subr.mxu0 0.0
    %80 = vmatpush1.msra.mxu0 0.0
    %81 = vmatprep.subr.mxu0 0.0
    %82 = vmatpush1.msra.mxu0 0.0
    %83 = vmatprep.subr.mxu0 0.0
    %84 = vmatpush1.msra.mxu0 0.0
    %85 = vmatprep.subr.mxu0 0.0
    %86 = vmatpush1.msra.mxu0 0.0
    %87 = vmatprep.subr.mxu0 0.0
    %88 = vmatpush1.msra.mxu0 0.0
    %89 = vmatprep.subr.mxu0 0.0
    %90 = vmatpush1.msra.mxu0 0.0
    %91 = vmatprep.subr.mxu0 0.0
    %92 = vmatpush1.msra.mxu0 0.0
    %93 = vmatprep.subr.mxu0 0.0
    %94 = vmatpush1.msra.mxu0 0.0
    %95 = vmatprep.subr.mxu0 0.0
    %96 = vmatpush1.msra.mxu0 0.0
    %97 = vmatprep.subr.mxu0 0.0
    %98 = vmatpush1.msra.mxu0 0.0
    %99 = vmatprep.subr.mxu0 0.0
    %100 = vmatpush1.msra.mxu0 0.0
    %101 = vmatprep.subr.mxu0 0.0
    %102 = vmatpush1.msra.mxu0 0.0
    %103 = vmatprep.subr.mxu0 0.0
    %104 = vmatpush1.msra.mxu0 0.0
    %105 = vmatprep.subr.mxu0 0.0
    %106 = vmatpush1.msra.mxu0 0.0
    %107 = vmatprep.subr.mxu0 0.0
    %108 = vmatpush1.msra.mxu0 0.0
    %109 = vmatprep.subr.mxu0 0.0
    %110 = vmatpush1.msra.mxu0 0.0
    %111 = vmatprep.subr.mxu0 0.0
    %112 = vmatpush1.msra.mxu0 0.0
    %113 = vmatprep.subr.mxu0 0.0
    %114 = vmatpush1.msra.mxu0 0.0
    %115 = vmatprep.subr.mxu0 0.0
    %116 = vmatpush1.msra.mxu0 0.0
    %117 = vmatprep.subr.mxu0 0.0
    %118 = vmatpush1.msra.mxu0 0.0
    %119 = vmatprep.mubr.f32.mxu0 0.0
    %120 = vmatmul.mubr.f32.gmra.mrb[0].mxu0 %v53
    %v121 = vpop.f32.mrb[0].mxu0
    %v122 = vadd.f32 0.0, %v121
    %v123 = vpop.f32.mrb[0].mxu0
    %124 = vdwg.mxu0
    %v125 = vadd.f32 %v47, %v122
    %v126 = vtanh.pop %v125
    %v127 = vmul.f32 %v126, 0.5
    %v128 = vadd.f32 %v127, 0.5
    %v129 = vsel %vm50, %v126, %v128
    %130 = vrot.lane.b32.xlu0 %v129, 64
    %v131 = vpop.permute.xlu0 %130
    %v132 = vmul.f32 %v129, %v131
    %v133 = vmul.f32 %v129, 0.0
    %135 = vrot.lane.b32.xlu0 %v132, 96
    %v136 = vpop.permute.xlu0 %135
    %v138 = vadd.f32 %v133, %v136
    %v139 = vtanh.pop %v138
    %v140 = vmul.f32 %v131, %v139
    %v142 = vsel %vm51, %v140, 0
    %144 = vmatprep.subr.mxu0 0.0
    %145 = vmatpush1.msra.mxu0 %v26
    %146 = vmatprep.subr.mxu0 0.0
    %147 = vmatpush1.msra.mxu0 %v27
    %148 = vmatprep.subr.mxu0 0.0
    %149 = vmatpush1.msra.mxu0 %v28
    %150 = vmatprep.subr.mxu0 0.0
    %151 = vmatpush1.msra.mxu0 %v29
    %152 = vmatprep.subr.mxu0 0.0
    %153 = vmatpush1.msra.mxu0 0.0
    %154 = vmatprep.subr.mxu0 0.0
    %155 = vmatpush1.msra.mxu0 0.0
    %156 = vmatprep.subr.mxu0 0.0
    %157 = vmatpush1.msra.mxu0 0.0
    %158 = vmatprep.subr.mxu0 0.0
    %159 = vmatpush1.msra.mxu0 0.0
    %160 = vmatprep.subr.mxu0 0.0
    %161 = vmatpush1.msra.mxu0 0.0
    %162 = vmatprep.subr.mxu0 0.0
    %163 = vmatpush1.msra.mxu0 0.0
    %164 = vmatprep.subr.mxu0 0.0
    %165 = vmatpush1.msra.mxu0 0.0
    %166 = vmatprep.subr.mxu0 0.0
    %167 = vmatpush1.msra.mxu0 0.0
    %168 = vmatprep.subr.mxu0 0.0
    %169 = vmatpush1.msra.mxu0 0.0
    %170 = vmatprep.subr.mxu0 0.0
    %171 = vmatpush1.msra.mxu0 0.0
    %172 = vmatprep.subr.mxu0 0.0
    %173 = vmatpush1.msra.mxu0 0.0
    %174 = vmatprep.subr.mxu0 0.0
    %175 = vmatpush1.msra.mxu0 0.0
    %176 = vmatprep.subr.mxu0 0.0
    %177 = vmatpush1.msra.mxu0 0.0
    %178 = vmatprep.subr.mxu0 0.0
    %179 = vmatpush1.msra.mxu0 0.0
    %180 = vmatprep.subr.mxu0 0.0
    %181 = vmatpush1.msra.mxu0 0.0
    %182 = vmatprep.subr.mxu0 0.0
    %183 = vmatpush1.msra.mxu0 0.0
    %184 = vmatprep.subr.mxu0 0.0
    %185 = vmatpush1.msra.mxu0 0.0
    %186 = vmatprep.subr.mxu0 0.0
    %187 = vmatpush1.msra.mxu0 0.0
    %188 = vmatprep.subr.mxu0 0.0
    %189 = vmatpush1.msra.mxu0 0.0
    %190 = vmatprep.subr.mxu0 0.0
    %191 = vmatpush1.msra.mxu0 0.0
    %192 = vmatprep.subr.mxu0 0.0
    %193 = vmatpush1.msra.mxu0 0.0
    %194 = vmatprep.subr.mxu0 0.0
    %195 = vmatpush1.msra.mxu0 0.0
    %196 = vmatprep.subr.mxu0 0.0
    %197 = vmatpush1.msra.mxu0 0.0
    %198 = vmatprep.subr.mxu0 0.0
    %199 = vmatpush1.msra.mxu0 0.0
    %200 = vmatprep.subr.mxu0 0.0
    %201 = vmatpush1.msra.mxu0 0.0
    %202 = vmatprep.subr.mxu0 0.0
    %203 = vmatpush1.msra.mxu0 0.0
    %204 = vmatprep.subr.mxu0 0.0
    %205 = vmatpush1.msra.mxu0 0.0
    %206 = vmatprep.subr.mxu0 0.0
    %207 = vmatpush1.msra.mxu0 0.0
    %208 = vmatprep.mubr.f32.mxu0 0.0
    %209 = vmatmul.mubr.f32.gmra.mrb[0].mxu0 %v142
    %v210 = vpop.f32.mrb[0].mxu0
    %v211 = vadd.f32 0.0, %v210
    %v212 = vpop.f32.mrb[0].mxu0
    %213 = vdwg.mxu0
    %v215 = vrot.slane %v211, 7
    %v217 = vadd.f32 %v47, %v215
    %v218 = vtanh.pop %v217
    %v219 = vmul.f32 %v218, 0.5
    %v220 = vadd.f32 %v219, 0.5
    %v221 = vsel %vm50, %v218, %v220
    %v223 = vrot.slane %v221, 1
    %225 = vrot.lane.b32.xlu0 %v223, 64
    %v226 = vpop.permute.xlu0 %225
    %v228 = vrot.slane %v226, 7
    %v230 = vmul.f32 %v221, %v228
    %v232 = vrot.slane %v138, 7
    %v234 = vmul.f32 %v221, %v232
    %236 = vrot.lane.b32.xlu0 %v230, 96
    %v237 = vpop.permute.xlu0 %236
    %v239 = vadd.f32 %v234, %v237
    %v240 = vtanh.pop %v239
    %v242 = vrot.slane %v240, 1
    %v244 = vmul.f32 %v226, %v242
    %v246 = vsel %vm51, %v244, 0
    %248 = vmatprep.subr.mxu0 0.0
    %249 = vmatpush1.msra.mxu0 %v26
    %250 = vmatprep.subr.mxu0 0.0
    %251 = vmatpush1.msra.mxu0 %v27
    %252 = vmatprep.subr.mxu0 0.0
    %253 = vmatpush1.msra.mxu0 %v28
    %254 = vmatprep.subr.mxu0 0.0
    %255 = vmatpush1.msra.mxu0 %v29
    %256 = vmatprep.subr.mxu0 0.0
    %257 = vmatpush1.msra.mxu0 0.0
    %258 = vmatprep.subr.mxu0 0.0
    %259 = vmatpush1.msra.mxu0 0.0
    %260 = vmatprep.subr.mxu0 0.0
    %261 = vmatpush1.msra.mxu0 0.0
    %262 = vmatprep.subr.mxu0 0.0
    %263 = vmatpush1.msra.mxu0 0.0
    %264 = vmatprep.subr.mxu0 0.0
    %265 = vmatpush1.msra.mxu0 0.0
    %266 = vmatprep.subr.mxu0 0.0
    %267 = vmatpush1.msra.mxu0 0.0
    %268 = vmatprep.subr.mxu0 0.0
    %269 = vmatpush1.msra.mxu0 0.0
    %270 = vmatprep.subr.mxu0 0.0
    %271 = vmatpush1.msra.mxu0 0.0
    %272 = vmatprep.subr.mxu0 0.0
    %273 = vmatpush1.msra.mxu0 0.0
    %274 = vmatprep.subr.mxu0 0.0
    %275 = vmatpush1.msra.mxu0 0.0
    %276 = vmatprep.subr.mxu0 0.0
    %277 = vmatpush1.msra.mxu0 0.0
    %278 = vmatprep.subr.mxu0 0.0
    %279 = vmatpush1.msra.mxu0 0.0
    %280 = vmatprep.subr.mxu0 0.0
    %281 = vmatpush1.msra.mxu0 0.0
    %282 = vmatprep.subr.mxu0 0.0
    %283 = vmatpush1.msra.mxu0 0.0
    %284 = vmatprep.subr.mxu0 0.0
    %285 = vmatpush1.msra.mxu0 0.0
    %286 = vmatprep.subr.mxu0 0.0
    %287 = vmatpush1.msra.mxu0 0.0
    %288 = vmatprep.subr.mxu0 0.0
    %289 = vmatpush1.msra.mxu0 0.0
    %290 = vmatprep.subr.mxu0 0.0
    %291 = vmatpush1.msra.mxu0 0.0
    %292 = vmatprep.subr.mxu0 0.0
    %293 = vmatpush1.msra.mxu0 0.0
    %294 = vmatprep.subr.mxu0 0.0
    %295 = vmatpush1.msra.mxu0 0.0
    %296 = vmatprep.subr.mxu0 0.0
    %297 = vmatpush1.msra.mxu0 0.0
    %298 = vmatprep.subr.mxu0 0.0
    %299 = vmatpush1.msra.mxu0 0.0
    %300 = vmatprep.subr.mxu0 0.0
    %301 = vmatpush1.msra.mxu0 0.0
    %302 = vmatprep.subr.mxu0 0.0
    %303 = vmatpush1.msra.mxu0 0.0
    %304 = vmatprep.subr.mxu0 0.0
    %305 = vmatpush1.msra.mxu0 0.0
    %306 = vmatprep.subr.mxu0 0.0
    %307 = vmatpush1.msra.mxu0 0.0
    %308 = vmatprep.subr.mxu0 0.0
    %309 = vmatpush1.msra.mxu0 0.0
    %310 = vmatprep.subr.mxu0 0.0
    %311 = vmatpush1.msra.mxu0 0.0
    %312 = vmatprep.mubr.f32.mxu0 0.0
    %313 = vmatmul.mubr.f32.gmra.mrb[0].mxu0 %v246
    %v314 = vpop.f32.mrb[0].mxu0
    %v315 = vadd.f32 0.0, %v314
    %v316 = vpop.f32.mrb[0].mxu0
    %317 = vdwg.mxu0
    %v319 = vrot.slane %v315, 6
    %v321 = vadd.f32 %v47, %v319
    %v322 = vtanh.pop %v321
    %v323 = vmul.f32 %v322, 0.5
    %v324 = vadd.f32 %v323, 0.5
    %v325 = vsel %vm50, %v322, %v324
    %v327 = vrot.slane %v325, 2
    %329 = vrot.lane.b32.xlu0 %v327, 64
    %v330 = vpop.permute.xlu0 %329
    %v332 = vrot.slane %v330, 6
    %v334 = vmul.f32 %v325, %v332
    %v336 = vrot.slane %v239, 7
    %v338 = vmul.f32 %v325, %v336
    %340 = vrot.lane.b32.xlu0 %v334, 96
    %v341 = vpop.permute.xlu0 %340
    %v343 = vadd.f32 %v338, %v341
    %v344 = vtanh.pop %v343
    %v346 = vrot.slane %v344, 2
    %v348 = vmul.f32 %v330, %v346
    %v350 = vsel %vm51, %v348, 0
    %352 = vmatprep.subr.mxu0 0.0
    %353 = vmatpush1.msra.mxu0 %v26
    %354 = vmatprep.subr.mxu0 0.0
    %355 = vmatpush1.msra.mxu0 %v27
    %356 = vmatprep.subr.mxu0 0.0
    %357 = vmatpush1.msra.mxu0 %v28
    %358 = vmatprep.subr.mxu0 0.0
    %359 = vmatpush1.msra.mxu0 %v29
    %360 = vmatprep.subr.mxu0 0.0
    %361 = vmatpush1.msra.mxu0 0.0
    %362 = vmatprep.subr.mxu0 0.0
    %363 = vmatpush1.msra.mxu0 0.0
    %364 = vmatprep.subr.mxu0 0.0
    %365 = vmatpush1.msra.mxu0 0.0
    %366 = vmatprep.subr.mxu0 0.0
    %367 = vmatpush1.msra.mxu0 0.0
    %368 = vmatprep.subr.mxu0 0.0
    %369 = vmatpush1.msra.mxu0 0.0
    %370 = vmatprep.subr.mxu0 0.0
    %371 = vmatpush1.msra.mxu0 0.0
    %372 = vmatprep.subr.mxu0 0.0
    %373 = vmatpush1.msra.mxu0 0.0
    %374 = vmatprep.subr.mxu0 0.0
    %375 = vmatpush1.msra.mxu0 0.0
    %376 = vmatprep.subr.mxu0 0.0
    %377 = vmatpush1.msra.mxu0 0.0
    %378 = vmatprep.subr.mxu0 0.0
    %379 = vmatpush1.msra.mxu0 0.0
    %380 = vmatprep.subr.mxu0 0.0
    %381 = vmatpush1.msra.mxu0 0.0
    %382 = vmatprep.subr.mxu0 0.0
    %383 = vmatpush1.msra.mxu0 0.0
    %384 = vmatprep.subr.mxu0 0.0
    %385 = vmatpush1.msra.mxu0 0.0
    %386 = vmatprep.subr.mxu0 0.0
    %387 = vmatpush1.msra.mxu0 0.0
    %388 = vmatprep.subr.mxu0 0.0
    %389 = vmatpush1.msra.mxu0 0.0
    %390 = vmatprep.subr.mxu0 0.0
    %391 = vmatpush1.msra.mxu0 0.0
    %392 = vmatprep.subr.mxu0 0.0
    %393 = vmatpush1.msra.mxu0 0.0
    %394 = vmatprep.subr.mxu0 0.0
    %395 = vmatpush1.msra.mxu0 0.0
    %396 = vmatprep.subr.mxu0 0.0
    %397 = vmatpush1.msra.mxu0 0.0
    %398 = vmatprep.subr.mxu0 0.0
    %399 = vmatpush1.msra.mxu0 0.0
    %400 = vmatprep.subr.mxu0 0.0
    %401 = vmatpush1.msra.mxu0 0.0
    %402 = vmatprep.subr.mxu0 0.0
    %403 = vmatpush1.msra.mxu0 0.0
    %404 = vmatprep.subr.mxu0 0.0
    %405 = vmatpush1.msra.mxu0 0.0
    %406 = vmatprep.subr.mxu0 0.0
    %407 = vmatpush1.msra.mxu0 0.0
    %408 = vmatprep.subr.mxu0 0.0
    %409 = vmatpush1.msra.mxu0 0.0
    %410 = vmatprep.subr.mxu0 0.0
    %411 = vmatpush1.msra.mxu0 0.0
    %412 = vmatprep.subr.mxu0 0.0
    %413 = vmatpush1.msra.mxu0 0.0
    %414 = vmatprep.subr.mxu0 0.0
    %415 = vmatpush1.msra.mxu0 0.0
    %416 = vmatprep.mubr.f32.mxu0 0.0
    %417 = vmatmul.mubr.f32.gmra.mrb[0].mxu0 %v350
    %v418 = vpop.f32.mrb[0].mxu0
    %v419 = vadd.f32 0.0, %v418
    %v420 = vpop.f32.mrb[0].mxu0
    %421 = vdwg.mxu0
    %v423 = vrot.slane %v419, 5
    %v425 = vadd.f32 %v47, %v423
    %v426 = vtanh.pop %v425
    %v427 = vmul.f32 %v426, 0.5
    %v428 = vadd.f32 %v427, 0.5
    %v429 = vsel %vm50, %v426, %v428
    %v431 = vrot.slane %v429, 3
    %433 = vrot.lane.b32.xlu0 %v431, 64
    %v434 = vpop.permute.xlu0 %433
    %v436 = vrot.slane %v434, 5
    %v438 = vmul.f32 %v429, %v436
    %v440 = vrot.slane %v343, 7
    %v442 = vmul.f32 %v429, %v440
    %444 = vrot.lane.b32.xlu0 %v438, 96
    %v445 = vpop.permute.xlu0 %444
    %v447 = vadd.f32 %v442, %v445
    %v448 = vtanh.pop %v447
    %v450 = vrot.slane %v448, 3
    %v452 = vmul.f32 %v434, %v450
    %v454 = vsel %vm51, %v452, 0
    %456 = vmatprep.subr.mxu0 0.0
    %457 = vmatpush1.msra.mxu0 %v26
    %458 = vmatprep.subr.mxu0 0.0
    %459 = vmatpush1.msra.mxu0 %v27
    %460 = vmatprep.subr.mxu0 0.0
    %461 = vmatpush1.msra.mxu0 %v28
    %462 = vmatprep.subr.mxu0 0.0
    %463 = vmatpush1.msra.mxu0 %v29
    %464 = vmatprep.subr.mxu0 0.0
    %465 = vmatpush1.msra.mxu0 0.0
    %466 = vmatprep.subr.mxu0 0.0
    %467 = vmatpush1.msra.mxu0 0.0
    %468 = vmatprep.subr.mxu0 0.0
    %469 = vmatpush1.msra.mxu0 0.0
    %470 = vmatprep.subr.mxu0 0.0
    %471 = vmatpush1.msra.mxu0 0.0
    %472 = vmatprep.subr.mxu0 0.0
    %473 = vmatpush1.msra.mxu0 0.0
    %474 = vmatprep.subr.mxu0 0.0
    %475 = vmatpush1.msra.mxu0 0.0
    %476 = vmatprep.subr.mxu0 0.0
    %477 = vmatpush1.msra.mxu0 0.0
    %478 = vmatprep.subr.mxu0 0.0
    %479 = vmatpush1.msra.mxu0 0.0
    %480 = vmatprep.subr.mxu0 0.0
    %481 = vmatpush1.msra.mxu0 0.0
    %482 = vmatprep.subr.mxu0 0.0
    %483 = vmatpush1.msra.mxu0 0.0
    %484 = vmatprep.subr.mxu0 0.0
    %485 = vmatpush1.msra.mxu0 0.0
    %486 = vmatprep.subr.mxu0 0.0
    %487 = vmatpush1.msra.mxu0 0.0
    %488 = vmatprep.subr.mxu0 0.0
    %489 = vmatpush1.msra.mxu0 0.0
    %490 = vmatprep.subr.mxu0 0.0
    %491 = vmatpush1.msra.mxu0 0.0
    %492 = vmatprep.subr.mxu0 0.0
    %493 = vmatpush1.msra.mxu0 0.0
    %494 = vmatprep.subr.mxu0 0.0
    %495 = vmatpush1.msra.mxu0 0.0
    %496 = vmatprep.subr.mxu0 0.0
    %497 = vmatpush1.msra.mxu0 0.0
    %498 = vmatprep.subr.mxu0 0.0
    %499 = vmatpush1.msra.mxu0 0.0
    %500 = vmatprep.subr.mxu0 0.0
    %501 = vmatpush1.msra.mxu0 0.0
    %502 = vmatprep.subr.mxu0 0.0
    %503 = vmatpush1.msra.mxu0 0.0
    %504 = vmatprep.subr.mxu0 0.0
    %505 = vmatpush1.msra.mxu0 0.0
    %506 = vmatprep.subr.mxu0 0.0
    %507 = vmatpush1.msra.mxu0 0.0
    %508 = vmatprep.subr.mxu0 0.0
    %509 = vmatpush1.msra.mxu0 0.0
    %510 = vmatprep.subr.mxu0 0.0
    %511 = vmatpush1.msra.mxu0 0.0
    %512 = vmatprep.subr.mxu0 0.0
    %513 = vmatpush1.msra.mxu0 0.0
    %514 = vmatprep.subr.mxu0 0.0
    %515 = vmatpush1.msra.mxu0 0.0
    %516 = vmatprep.subr.mxu0 0.0
    %517 = vmatpush1.msra.mxu0 0.0
    %518 = vmatprep.subr.mxu0 0.0
    %519 = vmatpush1.msra.mxu0 0.0
    %520 = vmatprep.mubr.f32.mxu0 0.0
    %521 = vmatmul.mubr.f32.gmra.mrb[0].mxu0 %v454
    %v522 = vpop.f32.mrb[0].mxu0
    %v523 = vadd.f32 0.0, %v522
    %v524 = vpop.f32.mrb[0].mxu0
    %525 = vdwg.mxu0
    %v527 = vrot.slane %v523, 4
    %v529 = vadd.f32 %v47, %v527
    %v530 = vtanh.pop %v529
    %v531 = vmul.f32 %v530, 0.5
    %v532 = vadd.f32 %v531, 0.5
    %v533 = vsel %vm50, %v530, %v532
    %v535 = vrot.slane %v533, 4
    %537 = vrot.lane.b32.xlu0 %v535, 64
    %v538 = vpop.permute.xlu0 %537
    %v540 = vrot.slane %v538, 4
    %v542 = vmul.f32 %v533, %v540
    %v544 = vrot.slane %v447, 7
    %v546 = vmul.f32 %v533, %v544
    %548 = vrot.lane.b32.xlu0 %v542, 96
    %v549 = vpop.permute.xlu0 %548
    %v551 = vadd.f32 %v546, %v549
    %v552 = vtanh.pop %v551
    %v554 = vrot.slane %v552, 4
    %v556 = vmul.f32 %v538, %v554
    %v558 = vsel %vm51, %v556, 0
    %560 = vmatprep.subr.mxu0 0.0
    %561 = vmatpush1.msra.mxu0 %v26
    %562 = vmatprep.subr.mxu0 0.0
    %563 = vmatpush1.msra.mxu0 %v27
    %564 = vmatprep.subr.mxu0 0.0
    %565 = vmatpush1.msra.mxu0 %v28
    %566 = vmatprep.subr.mxu0 0.0
    %567 = vmatpush1.msra.mxu0 %v29
    %568 = vmatprep.subr.mxu0 0.0
    %569 = vmatpush1.msra.mxu0 0.0
    %570 = vmatprep.subr.mxu0 0.0
    %571 = vmatpush1.msra.mxu0 0.0
    %572 = vmatprep.subr.mxu0 0.0
    %573 = vmatpush1.msra.mxu0 0.0
    %574 = vmatprep.subr.mxu0 0.0
    %575 = vmatpush1.msra.mxu0 0.0
    %576 = vmatprep.subr.mxu0 0.0
    %577 = vmatpush1.msra.mxu0 0.0
    %578 = vmatprep.subr.mxu0 0.0
    %579 = vmatpush1.msra.mxu0 0.0
    %580 = vmatprep.subr.mxu0 0.0
    %581 = vmatpush1.msra.mxu0 0.0
    %582 = vmatprep.subr.mxu0 0.0
    %583 = vmatpush1.msra.mxu0 0.0
    %584 = vmatprep.subr.mxu0 0.0
    %585 = vmatpush1.msra.mxu0 0.0
    %586 = vmatprep.subr.mxu0 0.0
    %587 = vmatpush1.msra.mxu0 0.0
    %588 = vmatprep.subr.mxu0 0.0
    %589 = vmatpush1.msra.mxu0 0.0
    %590 = vmatprep.subr.mxu0 0.0
    %591 = vmatpush1.msra.mxu0 0.0
    %592 = vmatprep.subr.mxu0 0.0
    %593 = vmatpush1.msra.mxu0 0.0
    %594 = vmatprep.subr.mxu0 0.0
    %595 = vmatpush1.msra.mxu0 0.0
    %596 = vmatprep.subr.mxu0 0.0
    %597 = vmatpush1.msra.mxu0 0.0
    %598 = vmatprep.subr.mxu0 0.0
    %599 = vmatpush1.msra.mxu0 0.0
    %600 = vmatprep.subr.mxu0 0.0
    %601 = vmatpush1.msra.mxu0 0.0
    %602 = vmatprep.subr.mxu0 0.0
    %603 = vmatpush1.msra.mxu0 0.0
    %604 = vmatprep.subr.mxu0 0.0
    %605 = vmatpush1.msra.mxu0 0.0
    %606 = vmatprep.subr.mxu0 0.0
    %607 = vmatpush1.msra.mxu0 0.0
    %608 = vmatprep.subr.mxu0 0.0
    %609 = vmatpush1.msra.mxu0 0.0
    %610 = vmatprep.subr.mxu0 0.0
    %611 = vmatpush1.msra.mxu0 0.0
    %612 = vmatprep.subr.mxu0 0.0
    %613 = vmatpush1.msra.mxu0 0.0
    %614 = vmatprep.subr.mxu0 0.0
    %615 = vmatpush1.msra.mxu0 0.0
    %616 = vmatprep.subr.mxu0 0.0
    %617 = vmatpush1.msra.mxu0 0.0
    %618 = vmatprep.subr.mxu0 0.0
    %619 = vmatpush1.msra.mxu0 0.0
    %620 = vmatprep.subr.mxu0 0.0
    %621 = vmatpush1.msra.mxu0 0.0
    %622 = vmatprep.subr.mxu0 0.0
    %623 = vmatpush1.msra.mxu0 0.0
    %624 = vmatprep.mubr.f32.mxu0 0.0
    %625 = vmatmul.mubr.f32.gmra.mrb[0].mxu0 %v558
    %v626 = vpop.f32.mrb[0].mxu0
    %v627 = vadd.f32 0.0, %v626
    %v628 = vpop.f32.mrb[0].mxu0
    %629 = vdwg.mxu0
    %v631 = vrot.slane %v627, 3
    %v633 = vadd.f32 %v47, %v631
    %v634 = vtanh.pop %v633
    %v635 = vmul.f32 %v634, 0.5
    %v636 = vadd.f32 %v635, 0.5
    %v637 = vsel %vm50, %v634, %v636
    %v639 = vrot.slane %v637, 5
    %641 = vrot.lane.b32.xlu0 %v639, 64
    %v642 = vpop.permute.xlu0 %641
    %v644 = vrot.slane %v642, 3
    %v646 = vmul.f32 %v637, %v644
    %v648 = vrot.slane %v551, 7
    %v650 = vmul.f32 %v637, %v648
    %652 = vrot.lane.b32.xlu0 %v646, 96
    %v653 = vpop.permute.xlu0 %652
    %v655 = vadd.f32 %v650, %v653
    %v656 = vtanh.pop %v655
    %v658 = vrot.slane %v656, 5
    %v660 = vmul.f32 %v642, %v658
    %v662 = vsel %vm51, %v660, 0
    %664 = vmatprep.subr.mxu0 0.0
    %665 = vmatpush1.msra.mxu0 %v26
    %666 = vmatprep.subr.mxu0 0.0
    %667 = vmatpush1.msra.mxu0 %v27
    %668 = vmatprep.subr.mxu0 0.0
    %669 = vmatpush1.msra.mxu0 %v28
    %670 = vmatprep.subr.mxu0 0.0
    %671 = vmatpush1.msra.mxu0 %v29
    %672 = vmatprep.subr.mxu0 0.0
    %673 = vmatpush1.msra.mxu0 0.0
    %674 = vmatprep.subr.mxu0 0.0
    %675 = vmatpush1.msra.mxu0 0.0
    %676 = vmatprep.subr.mxu0 0.0
    %677 = vmatpush1.msra.mxu0 0.0
    %678 = vmatprep.subr.mxu0 0.0
    %679 = vmatpush1.msra.mxu0 0.0
    %680 = vmatprep.subr.mxu0 0.0
    %681 = vmatpush1.msra.mxu0 0.0
    %682 = vmatprep.subr.mxu0 0.0
    %683 = vmatpush1.msra.mxu0 0.0
    %684 = vmatprep.subr.mxu0 0.0
    %685 = vmatpush1.msra.mxu0 0.0
    %686 = vmatprep.subr.mxu0 0.0
    %687 = vmatpush1.msra.mxu0 0.0
    %688 = vmatprep.subr.mxu0 0.0
    %689 = vmatpush1.msra.mxu0 0.0
    %690 = vmatprep.subr.mxu0 0.0
    %691 = vmatpush1.msra.mxu0 0.0
    %692 = vmatprep.subr.mxu0 0.0
    %693 = vmatpush1.msra.mxu0 0.0
    %694 = vmatprep.subr.mxu0 0.0
    %695 = vmatpush1.msra.mxu0 0.0
    %696 = vmatprep.subr.mxu0 0.0
    %697 = vmatpush1.msra.mxu0 0.0
    %698 = vmatprep.subr.mxu0 0.0
    %699 = vmatpush1.msra.mxu0 0.0
    %700 = vmatprep.subr.mxu0 0.0
    %701 = vmatpush1.msra.mxu0 0.0
    %702 = vmatprep.subr.mxu0 0.0
    %703 = vmatpush1.msra.mxu0 0.0
    %704 = vmatprep.subr.mxu0 0.0
    %705 = vmatpush1.msra.mxu0 0.0
    %706 = vmatprep.subr.mxu0 0.0
    %707 = vmatpush1.msra.mxu0 0.0
    %708 = vmatprep.subr.mxu0 0.0
    %709 = vmatpush1.msra.mxu0 0.0
    %710 = vmatprep.subr.mxu0 0.0
    %711 = vmatpush1.msra.mxu0 0.0
    %712 = vmatprep.subr.mxu0 0.0
    %713 = vmatpush1.msra.mxu0 0.0
    %714 = vmatprep.subr.mxu0 0.0
    %715 = vmatpush1.msra.mxu0 0.0
    %716 = vmatprep.subr.mxu0 0.0
    %717 = vmatpush1.msra.mxu0 0.0
    %718 = vmatprep.subr.mxu0 0.0
    %719 = vmatpush1.msra.mxu0 0.0
    %720 = vmatprep.subr.mxu0 0.0
    %721 = vmatpush1.msra.mxu0 0.0
    %722 = vmatprep.subr.mxu0 0.0
    %723 = vmatpush1.msra.mxu0 0.0
    %724 = vmatprep.subr.mxu0 0.0
    %725 = vmatpush1.msra.mxu0 0.0
    %726 = vmatprep.subr.mxu0 0.0
    %727 = vmatpush1.msra.mxu0 0.0
    %728 = vmatprep.mubr.f32.mxu0 0.0
    %729 = vmatmul.mubr.f32.gmra.mrb[0].mxu0 %v662
    %v730 = vpop.f32.mrb[0].mxu0
    %v731 = vadd.f32 0.0, %v730
    %v732 = vpop.f32.mrb[0].mxu0
    %733 = vdwg.mxu0
    %v735 = vrot.slane %v731, 2
    %v737 = vadd.f32 %v47, %v735
    %v738 = vtanh.pop %v737
    %v739 = vmul.f32 %v738, 0.5
    %v740 = vadd.f32 %v739, 0.5
    %v741 = vsel %vm50, %v738, %v740
    %v743 = vrot.slane %v741, 6
    %745 = vrot.lane.b32.xlu0 %v743, 64
    %v746 = vpop.permute.xlu0 %745
    %v748 = vrot.slane %v746, 2
    %v750 = vmul.f32 %v741, %v748
    %v752 = vrot.slane %v655, 7
    %v754 = vmul.f32 %v741, %v752
    %756 = vrot.lane.b32.xlu0 %v750, 96
    %v757 = vpop.permute.xlu0 %756
    %v759 = vadd.f32 %v754, %v757
    %v760 = vtanh.pop %v759
    %v762 = vrot.slane %v760, 6
    %v764 = vmul.f32 %v746, %v762
    %v766 = vsel %vm51, %v764, 0
    %768 = vmatprep.subr.mxu0 0.0
    %769 = vmatpush1.msra.mxu0 %v26
    %770 = vmatprep.subr.mxu0 0.0
    %771 = vmatpush1.msra.mxu0 %v27
    %772 = vmatprep.subr.mxu0 0.0
    %773 = vmatpush1.msra.mxu0 %v28
    %774 = vmatprep.subr.mxu0 0.0
    %775 = vmatpush1.msra.mxu0 %v29
    %776 = vmatprep.subr.mxu0 0.0
    %777 = vmatpush1.msra.mxu0 0.0
    %778 = vmatprep.subr.mxu0 0.0
    %779 = vmatpush1.msra.mxu0 0.0
    %780 = vmatprep.subr.mxu0 0.0
    %781 = vmatpush1.msra.mxu0 0.0
    %782 = vmatprep.subr.mxu0 0.0
    %783 = vmatpush1.msra.mxu0 0.0
    %784 = vmatprep.subr.mxu0 0.0
    %785 = vmatpush1.msra.mxu0 0.0
    %786 = vmatprep.subr.mxu0 0.0
    %787 = vmatpush1.msra.mxu0 0.0
    %788 = vmatprep.subr.mxu0 0.0
    %789 = vmatpush1.msra.mxu0 0.0
    %790 = vmatprep.subr.mxu0 0.0
    %791 = vmatpush1.msra.mxu0 0.0
    %792 = vmatprep.subr.mxu0 0.0
    %793 = vmatpush1.msra.mxu0 0.0
    %794 = vmatprep.subr.mxu0 0.0
    %795 = vmatpush1.msra.mxu0 0.0
    %796 = vmatprep.subr.mxu0 0.0
    %797 = vmatpush1.msra.mxu0 0.0
    %798 = vmatprep.subr.mxu0 0.0
    %799 = vmatpush1.msra.mxu0 0.0
    %800 = vmatprep.subr.mxu0 0.0
    %801 = vmatpush1.msra.mxu0 0.0
    %802 = vmatprep.subr.mxu0 0.0
    %803 = vmatpush1.msra.mxu0 0.0
    %804 = vmatprep.subr.mxu0 0.0
    %805 = vmatpush1.msra.mxu0 0.0
    %806 = vmatprep.subr.mxu0 0.0
    %807 = vmatpush1.msra.mxu0 0.0
    %808 = vmatprep.subr.mxu0 0.0
    %809 = vmatpush1.msra.mxu0 0.0
    %810 = vmatprep.subr.mxu0 0.0
    %811 = vmatpush1.msra.mxu0 0.0
    %812 = vmatprep.subr.mxu0 0.0
    %813 = vmatpush1.msra.mxu0 0.0
    %814 = vmatprep.subr.mxu0 0.0
    %815 = vmatpush1.msra.mxu0 0.0
    %816 = vmatprep.subr.mxu0 0.0
    %817 = vmatpush1.msra.mxu0 0.0
    %818 = vmatprep.subr.mxu0 0.0
    %819 = vmatpush1.msra.mxu0 0.0
    %820 = vmatprep.subr.mxu0 0.0
    %821 = vmatpush1.msra.mxu0 0.0
    %822 = vmatprep.subr.mxu0 0.0
    %823 = vmatpush1.msra.mxu0 0.0
    %824 = vmatprep.subr.mxu0 0.0
    %825 = vmatpush1.msra.mxu0 0.0
    %826 = vmatprep.subr.mxu0 0.0
    %827 = vmatpush1.msra.mxu0 0.0
    %828 = vmatprep.subr.mxu0 0.0
    %829 = vmatpush1.msra.mxu0 0.0
    %830 = vmatprep.subr.mxu0 0.0
    %831 = vmatpush1.msra.mxu0 0.0
    %832 = vmatprep.mubr.f32.mxu0 0.0
    %833 = vmatmul.mubr.f32.gmra.mrb[0].mxu0 %v766
    %v834 = vpop.f32.mrb[0].mxu0
    %v835 = vadd.f32 0.0, %v834
    %v836 = vpop.f32.mrb[0].mxu0
    %837 = vdwg.mxu0
    %v839 = vrot.slane %v835, 1
    %v841 = vadd.f32 %v47, %v839
    %v842 = vtanh.pop %v841
    %v843 = vmul.f32 %v842, 0.5
    %v844 = vadd.f32 %v843, 0.5
    %v845 = vsel %vm50, %v842, %v844
    %v847 = vrot.slane %v845, 7
    %849 = vrot.lane.b32.xlu0 %v847, 64
    %v850 = vpop.permute.xlu0 %849
    %v852 = vrot.slane %v850, 1
    %v854 = vmul.f32 %v845, %v852
    %v856 = vrot.slane %v759, 7
    %v858 = vmul.f32 %v845, %v856
    %860 = vrot.lane.b32.xlu0 %v854, 96
    %v861 = vpop.permute.xlu0 %860
    %v863 = vadd.f32 %v858, %v861
    %v864 = vtanh.pop %v863
    %v866 = vrot.slane %v864, 7
    %v868 = vmul.f32 %v850, %v866
    %v869 = vld [vmem:[#allocation2 + $0x22] sm:$0x1]
    %v870 = vld [vmem:[#allocation2 + $0x23] sm:$0x1]
    %v871 = vmul.f32 %v868, %v869
    %vm872 = vcmask 253952
    %v873 = vsel %vm872, %v871, 0.0
    %874 = vadd.xlane.f32.xlu0 %v873
    %v875 = vpop.xlane.xlu0 %874
    %v876 = vadd.f32 %v875, %v870
    %vm877 = vcmask 0
    %878 = vst.msk [vmem:[#allocation5] sm:$0x1] %vm877, %v876
    // Predicated region
    $region14: #{tpu_custom_call.1} parent=1 // pred_check
      _
    $region15: #{tpu_custom_call.1} parent=1 // pred_check_branch
      %880 = sbr.rel (0) target = $region17
    $region16: #{tpu_custom_call.1} parent=1 // pred_region
      %s882 = ssub.s32 16, 16
      %883 = vsyncadd [#allocation4], %s882
      %s885 = sshll.u32 [#allocation5], 4
      %s886 = int_to_ptr.vmem [resolvable:$true] %s885
      %888 = dma.vmem_to_hbm [thread:$0]  %s886, 16, %s2, [#allocation4]
    $region17: #{tpu_custom_call.1} parent=1 // pred_fallthru
      _
    // Predicated region
    $region18: #{tpu_custom_call.1} parent=1 // pred_check
      _
    $region19: #{tpu_custom_call.1} parent=1 // pred_check_branch
      %890 = sbr.rel (0) target = $region21
    $region20: #{tpu_custom_call.1} parent=1 // pred_region
      %891 = dma.done [#allocation4], 16
    $region21: #{tpu_custom_call.1} parent=1 // pred_fallthru
      _
    %892 = vsyncpa [#allocation3], 1
    %893 = vsyncpa [#allocation4], 1

</llo_original>
